<compile_context>
chip_gen: v7x
topology: tpu7x:2x2x1
jax: 0.10.0
libtpu: 0.0.40
codegen_flags: <defaults>
</compile_context>

<pallas_src>
import math

import jax
import jax.numpy as jnp
import numpy as np
from jax.experimental import pallas as pl
from jax.experimental.pallas import tpu as pltpu


def _fusion_kernel(f_ref, l_ref, pw_ref, pd_ref, ew_ref, ed_ref,
                   fab_ref, fw_ref, lab_ref, lw_ref,
                   f_out_ref, l_out_ref):
    # f_ref: (bc, hb*Wp) frontal row-tile, all batches/channels on sublanes.
    # l_ref: (bc, hb*Dp) lateral row-tile.
    f = f_ref[...].astype(jnp.float32)
    l = l_ref[...].astype(jnp.float32)

    # Per-row spatial mean as an MXU matmul against a trace-time constant:
    # stays in the flat lane-dense layout, no lane<->sublane relayout.
    f_col = jnp.dot(f, pw_ref[...], preferred_element_type=jnp.float32)   # (bc, hb)
    l_col = jnp.dot(l, pd_ref[...], preferred_element_type=jnp.float32)   # (bc, hb)

    def branch(x, col, ab_ref, w_ref, e_ref, out_ref):
        ab = ab_ref[...]                                  # (bc, 4) = [sn|bn|st|bt]
        # Native half: folded-BN affine + ReLU on the VPU, then the 1x1 conv
        # as a single block-diagonal kron(I_b, Wn) matmul over folded B*C.
        a = jnp.maximum(x * ab[:, 0:1] + ab[:, 1:2], 0.0)
        out = jnp.dot(w_ref[0], a, preferred_element_type=jnp.float32)
        # Transfer half: BN + ReLU on the pooled column, tiny conv, then
        # broadcast across the spatial width via a 0/1 matmul (relayout-free).
        b = jnp.maximum(col * ab[:, 2:3] + ab[:, 3:4], 0.0)
        t = jnp.dot(w_ref[1], b, preferred_element_type=jnp.float32)      # (bc, hb)
        out = out + jnp.dot(t, e_ref[...], preferred_element_type=jnp.float32)
        out_ref[...] = out.astype(out_ref.dtype)

    branch(f, l_col, fab_ref, fw_ref, ew_ref, f_out_ref)
    branch(l, f_col, lab_ref, lw_ref, ed_ref, l_out_ref)


def _round_up(x, m):
    return ((x + m - 1) // m) * m


def _pool_matrix(hb, width, width_pad):
    """(hb*width_pad, hb): per-local-row mean over the true width (pad weight 0)."""
    p = np.zeros((hb * width_pad, hb), np.float32)
    for h in range(hb):
        p[h * width_pad: h * width_pad + width, h] = 1.0 / width
    return jnp.asarray(p)


def _bcast_matrix(hb, width_pad):
    """(hb, hb*width_pad) 0/1 matrix: broadcast one value per local row over width."""
    e = np.zeros((hb, hb * width_pad), np.float32)
    for h in range(hb):
        e[h, h * width_pad: (h + 1) * width_pad] = 1.0
    return jnp.asarray(e)


def cross_sectional_fusion(frontal_nchw, lateral_nchw, params):
    """frontal_nchw: (B, C, H, W); lateral_nchw: (B, C, H, D). Returns NCHW outputs."""
    B, C, H, W = frontal_nchw.shape
    D = lateral_nchw.shape[3]
    BC = B * C
    f_scale, f_shift, f_w, l_scale, l_shift, l_w = params

    # --- row / batch tiling --------------------------------------------------
    def padded_widths(hb, n_h):
        if n_h == 1:                      # full-extent lane blocks: no padding needed
            return W, D
        u = 128 // math.gcd(128, hb)      # lane blocks must be multiples of 128
        return _round_up(W, u), _round_up(D, u)

    def footprint_bytes(b_blk, hb, n_h):
        # Double-buffered input AND output blocks + pool/bcast constants +
        # parameter tiles (VMEM pads sublanes to 8 and lanes to 128).
        bc = b_blk * C
        Wp, Dp = padded_widths(hb, n_h)
        n_w, n_d = hb * Wp, hb * Dp
        lane = lambda n: _round_up(n, 128) * 4
        data = _round_up(bc, 8) * (lane(n_w) + lane(n_d)) * 2            # in + out
        pool = (_round_up(n_w, 8) + _round_up(n_d, 8)) * lane(hb)
        bcast = _round_up(hb, 8) * (lane(n_w) + lane(n_d))
        small = _round_up(bc, 8) * lane(4) * 2 + 2 * _round_up(bc, 8) * lane(bc) * 2
        return 2 * (data + pool + bcast + small)                          # 2x buffers

    def bc_ok(b_blk):
        return b_blk == B or (b_blk * C) % 8 == 0

    budget = 6 * 2 ** 20   # stays well inside every chip's scoped-VMEM default
    b_blk, hb, n_b, n_h = B, H, 1, 1
    while footprint_bytes(b_blk, hb, n_h) > budget:
        if b_blk % 2 == 0 and bc_ok(b_blk // 2):
            b_blk //= 2; n_b *= 2          # pad-free shrink first
        elif hb % 2 == 0:
            hb //= 2; n_h *= 2
        else:
            break
    # v7x shards parallel grid axes over its 2 TensorCores: ensure >=2 grid
    # steps when the shape allows it cheaply.
    if n_b * n_h < 2 and hb % 2 == 0:
        wp2, dp2 = padded_widths(hb // 2, 2)
        if wp2 + dp2 <= 2 * (W + D):       # keep padding overhead modest
            hb //= 2; n_h *= 2
    if n_b * n_h < 2 and b_blk % 2 == 0 and bc_ok(b_blk // 2):
        b_blk //= 2; n_b *= 2

    bc_blk = b_blk * C
    Wp, Dp = padded_widths(hb, n_h)
    n_w, n_d = hb * Wp, hb * Dp

    # --- layout: fold B*C onto sublanes, merge (H, W) onto lanes (free) ------
    def prep(x, width, width_pad):
        if width_pad != width:
            x = jnp.pad(x, ((0, 0), (0, 0), (0, 0), (0, width_pad - width)))
        return x.reshape(BC, H * width_pad)

    f_flat = prep(frontal_nchw, W, Wp)
    l_flat = prep(lateral_nchw, D, Dp)

    # --- trace-time parameter packing ----------------------------------------
    def pack_affine(scale, shift):
        # (BC, 4) = [scale_native | shift_native | scale_transfer | shift_transfer]
        cols = [scale[:C], shift[:C], scale[C:], shift[C:]]
        return jnp.stack([jnp.tile(c.astype(jnp.float32), B) for c in cols], axis=1)

    def pack_weight(w):
        # (2, bc_blk, bc_blk): block-diagonal kron(I_b, Wn) / kron(I_b, Wt).
        eye = jnp.eye(b_blk, dtype=jnp.float32)
        wn = jnp.kron(eye, w[:, :C].astype(jnp.float32))
        wt = jnp.kron(eye, w[:, C:].astype(jnp.float32))
        return jnp.stack([wn, wt], axis=0)

    f_ab, l_ab = pack_affine(f_scale, f_shift), pack_affine(l_scale, l_shift)
    f_wk, l_wk = pack_weight(f_w), pack_weight(l_w)

    pw, pd = _pool_matrix(hb, W, Wp), _pool_matrix(hb, D, Dp)
    ew, ed = _bcast_matrix(hb, Wp), _bcast_matrix(hb, Dp)

    # --- pallas_call ----------------------------------------------------------
    data_f = pl.BlockSpec((bc_blk, n_w), lambda ib, ih: (ib, ih))
    data_l = pl.BlockSpec((bc_blk, n_d), lambda ib, ih: (ib, ih))
    out_f_spec = pl.BlockSpec((bc_blk, n_w), lambda ib, ih: (ib, ih))
    out_l_spec = pl.BlockSpec((bc_blk, n_d), lambda ib, ih: (ib, ih))
    affine = pl.BlockSpec((bc_blk, 4), lambda ib, ih: (ib, 0))
    const = lambda shape: pl.BlockSpec(shape, lambda ib, ih: (0,) * len(shape))

    f_out, l_out = pl.pallas_call(
        _fusion_kernel,
        out_shape=(jax.ShapeDtypeStruct((BC, H * Wp), jnp.float32),
                   jax.ShapeDtypeStruct((BC, H * Dp), jnp.float32)),
        grid_spec=pltpu.PrefetchScalarGridSpec(
            num_scalar_prefetch=0,
            grid=(n_b, n_h),
            in_specs=[
                data_f, data_l,
                const((n_w, hb)), const((n_d, hb)),
                const((hb, n_w)), const((hb, n_d)),
                affine, const((2, bc_blk, bc_blk)),
                affine, const((2, bc_blk, bc_blk)),
            ],
            out_specs=[out_f_spec, out_l_spec],
        ),
        compiler_params=pltpu.CompilerParams(
            dimension_semantics=("parallel", "parallel"),
            vmem_limit_bytes=32 * 1024 * 1024),
    )(f_flat, l_flat, pw, pd, ew, ed, f_ab, f_wk, l_ab, l_wk)

    # Free reshapes back to NCHW; slice off any lane padding.
    f_out = f_out.reshape(B, C, H, Wp)[..., :W]
    l_out = l_out.reshape(B, C, H, Dp)[..., :D]
    return f_out, l_out


def init_branch_params(key, C):
    """Deterministic folded BatchNorm2d(2C) + Conv2d(2C -> C, 1x1, bias=False) params."""
    kg, kb, km, kv, kw = jax.random.split(key, 5)
    eps = 1e-5
    gamma = 1.0 + 0.1 * jax.random.normal(kg, (2 * C,), jnp.float32)
    beta = 0.1 * jax.random.normal(kb, (2 * C,), jnp.float32)
    run_mean = 0.1 * jax.random.normal(km, (2 * C,), jnp.float32)
    run_var = 1.0 + 0.1 * jax.random.uniform(kv, (2 * C,), jnp.float32)
    scale = gamma / jnp.sqrt(run_var + eps)
    shift = beta - run_mean * scale
    # PyTorch Conv2d weight (C_out, C_in, 1, 1) squeezed -> (C, 2C).
    w = 0.1 * jax.random.normal(kw, (C, 2 * C), jnp.float32)
    return scale, shift, w


def reference(frontal, lateral, params):
    """Pure-JAX NCHW reference mirroring the PyTorch forward (eval-mode BN)."""
    f_scale, f_shift, f_w, l_scale, l_shift, l_w = params
    B, C, H, W = frontal.shape
    D = lateral.shape[3]
    f_col = jnp.mean(frontal, axis=3, keepdims=True)          # (B, C, H, 1)
    l_col = jnp.mean(lateral, axis=3, keepdims=True)          # (B, C, H, 1)
    f_transfer = jnp.broadcast_to(f_col, (B, C, H, D))
    l_transfer = jnp.broadcast_to(l_col, (B, C, H, W))
    f_cat = jnp.concatenate([frontal, l_transfer], axis=1)    # (B, 2C, H, W)
    l_cat = jnp.concatenate([lateral, f_transfer], axis=1)    # (B, 2C, H, D)

    def branch(x, scale, shift, w):
        y = jnp.maximum(x * scale.reshape(1, -1, 1, 1) + shift.reshape(1, -1, 1, 1), 0.0)
        return jnp.einsum('bihw,oi->bohw', y, w)

    return branch(f_cat, f_scale, f_shift, f_w), branch(l_cat, l_scale, l_shift, l_w)


if __name__ == "__main__":
    key = jax.random.PRNGKey(0)
    k_f, k_l, k_pf, k_pl = jax.random.split(key, 4)

    B, C, H, W, D = 2, 4, 16, 16, 12
    frontal = jax.random.normal(k_f, (B, C, H, W), jnp.float32)
    lateral = jax.random.normal(k_l, (B, C, H, D), jnp.float32)

    params = (*init_branch_params(k_pf, C), *init_branch_params(k_pl, C))

    out_f, out_l = jax.jit(cross_sectional_fusion)(frontal, lateral, params)
    jax.block_until_ready((out_f, out_l))

    ref_f, ref_l = reference(frontal, lateral, params)
    np.testing.assert_allclose(np.asarray(out_f), np.asarray(ref_f), atol=1e-4, rtol=1e-4)
    np.testing.assert_allclose(np.asarray(out_l), np.asarray(ref_l), atol=1e-4, rtol=1e-4)

    print("KERNEL_OK")
</pallas_src>

<mosaic_0001>
module attributes {stable_mosaic.version = 11 : i64} {
  func.func @_fusion_kernel(%arg0: i32, %arg1: i32, %arg2: memref<8x128xf32, #tpu.memory_space<vmem>>, %arg3: memref<8x128xf32, #tpu.memory_space<vmem>>, %arg4: memref<128x8xf32, #tpu.memory_space<vmem>>, %arg5: memref<128x8xf32, #tpu.memory_space<vmem>>, %arg6: memref<8x128xf32, #tpu.memory_space<vmem>>, %arg7: memref<8x128xf32, #tpu.memory_space<vmem>>, %arg8: memref<8x4xf32, #tpu.memory_space<vmem>>, %arg9: memref<2x8x8xf32, #tpu.memory_space<vmem>>, %arg10: memref<8x4xf32, #tpu.memory_space<vmem>>, %arg11: memref<2x8x8xf32, #tpu.memory_space<vmem>>, %arg12: memref<8x128xf32, #tpu.memory_space<vmem>>, %arg13: memref<8x128xf32, #tpu.memory_space<vmem>>) attributes {dimension_semantics = [#tpu.dimension_semantics<parallel>, #tpu.dimension_semantics<parallel>], iteration_bounds = array<i64: 1, 2>, scalar_prefetch = 0 : i64, scratch_operands = 0 : i64, tpu.core_type = #tpu.core_type<tc>, window_params = [{transform_indices = @transform_0, window_bounds = array<i64: 8, 128>}, {transform_indices = @transform_1, window_bounds = array<i64: 8, 128>}, {pipeline_mode = #tpu.pipeline_mode<synchronous>, transform_indices = @transform_2, window_bounds = array<i64: 128, 8>}, {pipeline_mode = #tpu.pipeline_mode<synchronous>, transform_indices = @transform_3, window_bounds = array<i64: 128, 8>}, {pipeline_mode = #tpu.pipeline_mode<synchronous>, transform_indices = @transform_4, window_bounds = array<i64: 8, 128>}, {pipeline_mode = #tpu.pipeline_mode<synchronous>, transform_indices = @transform_5, window_bounds = array<i64: 8, 128>}, {transform_indices = @transform_6, window_bounds = array<i64: 8, 4>}, {pipeline_mode = #tpu.pipeline_mode<synchronous>, transform_indices = @transform_7, window_bounds = array<i64: 2, 8, 8>}, {transform_indices = @transform_8, window_bounds = array<i64: 8, 4>}, {pipeline_mode = #tpu.pipeline_mode<synchronous>, transform_indices = @transform_9, window_bounds = array<i64: 2, 8, 8>}, {transform_indices = @transform_10, window_bounds = array<i64: 8, 128>}, {transform_indices = @transform_11, window_bounds = array<i64: 8, 128>}]} {
    %c0 = arith.constant 0 : index
    %c0_0 = arith.constant 0 : index
    %0 = vector.load %arg2[%c0, %c0_0] : memref<8x128xf32, #tpu.memory_space<vmem>>, vector<8x128xf32>
    %c0_1 = arith.constant 0 : index
    %c0_2 = arith.constant 0 : index
    %1 = vector.load %arg3[%c0_1, %c0_2] : memref<8x128xf32, #tpu.memory_space<vmem>>, vector<8x128xf32>
    %c0_3 = arith.constant 0 : index
    %c0_4 = arith.constant 0 : index
    %2 = vector.load %arg4[%c0_3, %c0_4] : memref<128x8xf32, #tpu.memory_space<vmem>>, vector<128x8xf32>
    %cst = arith.constant dense<0.000000e+00> : vector<8x8xf32>
    %3 = tpu.matmul %0, %2, %cst {dimension_numbers = #tpu.dot_dimension_numbers<[1], [0], [0], [1], [0, 0, 1, 1], [], []>} : vector<8x128xf32>, vector<128x8xf32>, vector<8x8xf32> -> vector<8x8xf32>
    %c0_5 = arith.constant 0 : index
    %c0_6 = arith.constant 0 : index
    %4 = vector.load %arg5[%c0_5, %c0_6] : memref<128x8xf32, #tpu.memory_space<vmem>>, vector<128x8xf32>
    %cst_7 = arith.constant dense<0.000000e+00> : vector<8x8xf32>
    %5 = tpu.matmul %1, %4, %cst_7 {dimension_numbers = #tpu.dot_dimension_numbers<[1], [0], [0], [1], [0, 0, 1, 1], [], []>} : vector<8x128xf32>, vector<128x8xf32>, vector<8x8xf32> -> vector<8x8xf32>
    %c0_8 = arith.constant 0 : index
    %c0_9 = arith.constant 0 : index
    %6 = vector.load %arg8[%c0_8, %c0_9] : memref<8x4xf32, #tpu.memory_space<vmem>>, vector<8x4xf32>
    %7 = vector.extract_strided_slice %6 {offsets = [0, 0], sizes = [8, 1], strides = [1, 1]} : vector<8x4xf32> to vector<8x1xf32>
    %8 = vector.broadcast %7 : vector<8x1xf32> to vector<8x128xf32>
    %9 = arith.mulf %0, %8 : vector<8x128xf32>
    %10 = vector.extract_strided_slice %6 {offsets = [0, 1], sizes = [8, 1], strides = [1, 1]} : vector<8x4xf32> to vector<8x1xf32>
    %11 = vector.broadcast %10 : vector<8x1xf32> to vector<8x128xf32>
    %12 = arith.addf %9, %11 : vector<8x128xf32>
    %cst_10 = arith.constant 0.000000e+00 : f32
    %13 = vector.broadcast %cst_10 : f32 to vector<8x128xf32>
    %14 = arith.maximumf %12, %13 : vector<8x128xf32>
    %c0_11 = arith.constant 0 : index
    %c0_12 = arith.constant 0 : index
    %c0_13 = arith.constant 0 : index
    %15 = vector.load %arg9[%c0_11, %c0_12, %c0_13] : memref<2x8x8xf32, #tpu.memory_space<vmem>>, vector<1x8x8xf32>
    %16 = vector.shape_cast %15 : vector<1x8x8xf32> to vector<8x8xf32>
    %cst_14 = arith.constant dense<0.000000e+00> : vector<8x128xf32>
    %17 = tpu.matmul %16, %14, %cst_14 {dimension_numbers = #tpu.dot_dimension_numbers<[1], [0], [0], [1], [0, 0, 1, 1], [], []>} : vector<8x8xf32>, vector<8x128xf32>, vector<8x128xf32> -> vector<8x128xf32>
    %18 = vector.extract_strided_slice %6 {offsets = [0, 2], sizes = [8, 1], strides = [1, 1]} : vector<8x4xf32> to vector<8x1xf32>
    %19 = vector.broadcast %18 : vector<8x1xf32> to vector<8x8xf32>
    %20 = arith.mulf %5, %19 : vector<8x8xf32>
    %21 = vector.extract_strided_slice %6 {offsets = [0, 3], sizes = [8, 1], strides = [1, 1]} : vector<8x4xf32> to vector<8x1xf32>
    %22 = vector.broadcast %21 : vector<8x1xf32> to vector<8x8xf32>
    %23 = arith.addf %20, %22 : vector<8x8xf32>
    %cst_15 = arith.constant 0.000000e+00 : f32
    %24 = vector.broadcast %cst_15 : f32 to vector<8x8xf32>
    %25 = arith.maximumf %23, %24 : vector<8x8xf32>
    %c1 = arith.constant 1 : index
    %c0_16 = arith.constant 0 : index
    %c0_17 = arith.constant 0 : index
    %26 = vector.load %arg9[%c1, %c0_16, %c0_17] : memref<2x8x8xf32, #tpu.memory_space<vmem>>, vector<1x8x8xf32>
    %27 = vector.shape_cast %26 : vector<1x8x8xf32> to vector<8x8xf32>
    %cst_18 = arith.constant dense<0.000000e+00> : vector<8x8xf32>
    %28 = tpu.matmul %27, %25, %cst_18 {dimension_numbers = #tpu.dot_dimension_numbers<[1], [0], [0], [1], [0, 0, 1, 1], [], []>} : vector<8x8xf32>, vector<8x8xf32>, vector<8x8xf32> -> vector<8x8xf32>
    %c0_19 = arith.constant 0 : index
    %c0_20 = arith.constant 0 : index
    %29 = vector.load %arg6[%c0_19, %c0_20] : memref<8x128xf32, #tpu.memory_space<vmem>>, vector<8x128xf32>
    %cst_21 = arith.constant dense<0.000000e+00> : vector<8x128xf32>
    %30 = tpu.matmul %28, %29, %cst_21 {dimension_numbers = #tpu.dot_dimension_numbers<[1], [0], [0], [1], [0, 0, 1, 1], [], []>} : vector<8x8xf32>, vector<8x128xf32>, vector<8x128xf32> -> vector<8x128xf32>
    %31 = arith.addf %17, %30 : vector<8x128xf32>
    %c0_22 = arith.constant 0 : index
    %c0_23 = arith.constant 0 : index
    %32 = vector.load %arg12[%c0_22, %c0_23] : memref<8x128xf32, #tpu.memory_space<vmem>>, vector<8x128xf32>
    tpu.vector_store %arg12[%c0_22, %c0_23], %31 {strides = array<i32>} : memref<8x128xf32, #tpu.memory_space<vmem>>, vector<8x128xf32>,
    %c0_24 = arith.constant 0 : index
    %c0_25 = arith.constant 0 : index
    %33 = vector.load %arg10[%c0_24, %c0_25] : memref<8x4xf32, #tpu.memory_space<vmem>>, vector<8x4xf32>
    %34 = vector.extract_strided_slice %33 {offsets = [0, 0], sizes = [8, 1], strides = [1, 1]} : vector<8x4xf32> to vector<8x1xf32>
    %35 = vector.broadcast %34 : vector<8x1xf32> to vector<8x128xf32>
    %36 = arith.mulf %1, %35 : vector<8x128xf32>
    %37 = vector.extract_strided_slice %33 {offsets = [0, 1], sizes = [8, 1], strides = [1, 1]} : vector<8x4xf32> to vector<8x1xf32>
    %38 = vector.broadcast %37 : vector<8x1xf32> to vector<8x128xf32>
    %39 = arith.addf %36, %38 : vector<8x128xf32>
    %cst_26 = arith.constant 0.000000e+00 : f32
    %40 = vector.broadcast %cst_26 : f32 to vector<8x128xf32>
    %41 = arith.maximumf %39, %40 : vector<8x128xf32>
    %c0_27 = arith.constant 0 : index
    %c0_28 = arith.constant 0 : index
    %c0_29 = arith.constant 0 : index
    %42 = vector.load %arg11[%c0_27, %c0_28, %c0_29] : memref<2x8x8xf32, #tpu.memory_space<vmem>>, vector<1x8x8xf32>
    %43 = vector.shape_cast %42 : vector<1x8x8xf32> to vector<8x8xf32>
    %cst_30 = arith.constant dense<0.000000e+00> : vector<8x128xf32>
    %44 = tpu.matmul %43, %41, %cst_30 {dimension_numbers = #tpu.dot_dimension_numbers<[1], [0], [0], [1], [0, 0, 1, 1], [], []>} : vector<8x8xf32>, vector<8x128xf32>, vector<8x128xf32> -> vector<8x128xf32>
    %45 = vector.extract_strided_slice %33 {offsets = [0, 2], sizes = [8, 1], strides = [1, 1]} : vector<8x4xf32> to vector<8x1xf32>
    %46 = vector.broadcast %45 : vector<8x1xf32> to vector<8x8xf32>
    %47 = arith.mulf %3, %46 : vector<8x8xf32>
    %48 = vector.extract_strided_slice %33 {offsets = [0, 3], sizes = [8, 1], strides = [1, 1]} : vector<8x4xf32> to vector<8x1xf32>
    %49 = vector.broadcast %48 : vector<8x1xf32> to vector<8x8xf32>
    %50 = arith.addf %47, %49 : vector<8x8xf32>
    %cst_31 = arith.constant 0.000000e+00 : f32
    %51 = vector.broadcast %cst_31 : f32 to vector<8x8xf32>
    %52 = arith.maximumf %50, %51 : vector<8x8xf32>
    %c1_32 = arith.constant 1 : index
    %c0_33 = arith.constant 0 : index
    %c0_34 = arith.constant 0 : index
    %53 = vector.load %arg11[%c1_32, %c0_33, %c0_34] : memref<2x8x8xf32, #tpu.memory_space<vmem>>, vector<1x8x8xf32>
    %54 = vector.shape_cast %53 : vector<1x8x8xf32> to vector<8x8xf32>
    %cst_35 = arith.constant dense<0.000000e+00> : vector<8x8xf32>
    %55 = tpu.matmul %54, %52, %cst_35 {dimension_numbers = #tpu.dot_dimension_numbers<[1], [0], [0], [1], [0, 0, 1, 1], [], []>} : vector<8x8xf32>, vector<8x8xf32>, vector<8x8xf32> -> vector<8x8xf32>
    %c0_36 = arith.constant 0 : index
    %c0_37 = arith.constant 0 : index
    %56 = vector.load %arg7[%c0_36, %c0_37] : memref<8x128xf32, #tpu.memory_space<vmem>>, vector<8x128xf32>
    %cst_38 = arith.constant dense<0.000000e+00> : vector<8x128xf32>
    %57 = tpu.matmul %55, %56, %cst_38 {dimension_numbers = #tpu.dot_dimension_numbers<[1], [0], [0], [1], [0, 0, 1, 1], [], []>} : vector<8x8xf32>, vector<8x128xf32>, vector<8x128xf32> -> vector<8x128xf32>
    %58 = arith.addf %44, %57 : vector<8x128xf32>
    %c0_39 = arith.constant 0 : index
    %c0_40 = arith.constant 0 : index
    %59 = vector.load %arg13[%c0_39, %c0_40] : memref<8x128xf32, #tpu.memory_space<vmem>>, vector<8x128xf32>
    tpu.vector_store %arg13[%c0_39, %c0_40], %58 {strides = array<i32>} : memref<8x128xf32, #tpu.memory_space<vmem>>, vector<8x128xf32>,
    return
  }
  func.func @transform_0(%arg0: i32, %arg1: i32) -> (i32, i32) {
    %c0_i32 = arith.constant 0 : i32
    return %arg0, %arg1 : i32, i32
  }
  func.func @transform_1(%arg0: i32, %arg1: i32) -> (i32, i32) {
    %c0_i32 = arith.constant 0 : i32
    return %arg0, %arg1 : i32, i32
  }
  func.func @transform_2(%arg0: i32, %arg1: i32) -> (i32, i32) {
    %c0_i32 = arith.constant 0 : i32
    %c0_i32_0 = arith.constant 0 : i32
    %c0_i32_1 = arith.constant 0 : i32
    return %c0_i32, %c0_i32_0 : i32, i32
  }
  func.func @transform_3(%arg0: i32, %arg1: i32) -> (i32, i32) {
    %c0_i32 = arith.constant 0 : i32
    %c0_i32_0 = arith.constant 0 : i32
    %c0_i32_1 = arith.constant 0 : i32
    return %c0_i32, %c0_i32_0 : i32, i32
  }
  func.func @transform_4(%arg0: i32, %arg1: i32) -> (i32, i32) {
    %c0_i32 = arith.constant 0 : i32
    %c0_i32_0 = arith.constant 0 : i32
    %c0_i32_1 = arith.constant 0 : i32
    return %c0_i32, %c0_i32_0 : i32, i32
  }
  func.func @transform_5(%arg0: i32, %arg1: i32) -> (i32, i32) {
    %c0_i32 = arith.constant 0 : i32
    %c0_i32_0 = arith.constant 0 : i32
    %c0_i32_1 = arith.constant 0 : i32
    return %c0_i32, %c0_i32_0 : i32, i32
  }
  func.func @transform_6(%arg0: i32, %arg1: i32) -> (i32, i32) {
    %c0_i32 = arith.constant 0 : i32
    %c0_i32_0 = arith.constant 0 : i32
    return %arg0, %c0_i32 : i32, i32
  }
  func.func @transform_7(%arg0: i32, %arg1: i32) -> (i32, i32, i32) {
    %c0_i32 = arith.constant 0 : i32
    %c0_i32_0 = arith.constant 0 : i32
    %c0_i32_1 = arith.constant 0 : i32
    %c0_i32_2 = arith.constant 0 : i32
    return %c0_i32, %c0_i32_0, %c0_i32_1 : i32, i32, i32
  }
  func.func @transform_8(%arg0: i32, %arg1: i32) -> (i32, i32) {
    %c0_i32 = arith.constant 0 : i32
    %c0_i32_0 = arith.constant 0 : i32
    return %arg0, %c0_i32 : i32, i32
  }
  func.func @transform_9(%arg0: i32, %arg1: i32) -> (i32, i32, i32) {
    %c0_i32 = arith.constant 0 : i32
    %c0_i32_0 = arith.constant 0 : i32
    %c0_i32_1 = arith.constant 0 : i32
    %c0_i32_2 = arith.constant 0 : i32
    return %c0_i32, %c0_i32_0, %c0_i32_1 : i32, i32, i32
  }
  func.func @transform_10(%arg0: i32, %arg1: i32) -> (i32, i32) {
    %c0_i32 = arith.constant 0 : i32
    return %arg0, %arg1 : i32, i32
  }
  func.func @transform_11(%arg0: i32, %arg1: i32) -> (i32, i32) {
    %c0_i32 = arith.constant 0 : i32
    return %arg0, %arg1 : i32, i32
  }
}

</mosaic_0001>

<llo_original>
// kernel: tile.43
$region0: #{tile.43}
  #allocation0 [shape = 's32[1]{0}', space=sflag, size = 0x4, scoped, tag = 'scoped memory for tile.43']
  %s0 = inlined_call_operand.vmem [shape: f32[4], index: 0, kind: input, shape index: {}]
  %s1 = inlined_call_operand.vmem [shape: f32[2,4], index: 1, kind: output, shape index: {}]
  // Predicated region
  $region2: #{tile.43} parent=0 // pred_check
    _
  $region3: #{tile.43} parent=0 // pred_check_branch
    %3 = sbr.rel (0) target = $region5
  $region4: #{tile.43} parent=0 // pred_region
    _
  $region5: #{tile.43} parent=0 // pred_fallthru
    _
  %v4 = vld [vmem:[%s0] ss:$0 sm:$0xff]
  %5 = vst [vmem:[%s1] sm:$0x3] %v4

// kernel: tile.0
$region0: #{tile.0}
  %s0 = inlined_call_operand.vmem [shape: f32[2,4], index: 0, kind: input, shape index: {}]
  %s1 = inlined_call_operand.vmem [shape: f32[8,1], index: 1, kind: output, shape index: {}]
  $region1: #{tile.0} parent=0
    #allocation0 [shape = 'u8[4096]{0}', space=vmem, size = 0x1000, scoped, tag = 'scoped mem for input reshape']
    %s3 = sshllo.u32 0, 2
    %v4 = vld [vmem:[%s0] sm:%s3]
    %5 = vst [vmem:[#allocation0] sm:%s3] %v4
    %v6 = vld [vmem:[#allocation0] sm:$0x3]
    %vm7 = vcmask 7168
    %8 = vst.msk [vmem:[%s1] ss:$4 sm:$0x3] %vm7, %v6
    %v9 = vld [vmem:[#allocation0] sm:$0x3]
    %10 = vrot.lane.b32.xlu0 %v9, 127
    %v11 = vpop.permute.xlu0 %10
    %vm12 = vcmask 7168
    %s13 = scalar_lea.vmem %s1, 1
    %14 = vst.msk [vmem:[%s13] ss:$4 sm:$0x3] %vm12, %v11
    %v15 = vld [vmem:[#allocation0] sm:$0x3]
    %16 = vrot.lane.b32.xlu0 %v15, 126
    %v17 = vpop.permute.xlu0 %16
    %vm18 = vcmask 7168
    %s19 = scalar_lea.vmem %s1, 2
    %20 = vst.msk [vmem:[%s19] ss:$4 sm:$0x3] %vm18, %v17
    %v21 = vld [vmem:[#allocation0] sm:$0x3]
    %22 = vrot.lane.b32.xlu0 %v21, 125
    %v23 = vpop.permute.xlu0 %22
    %vm24 = vcmask 7168
    %s25 = scalar_lea.vmem %s1, 3
    %26 = vst.msk [vmem:[%s25] ss:$4 sm:$0x3] %vm24, %v23

</llo_original>
